<compile_context>
chip_gen: v5e
topology: v5e:2x2
jax: 0.10.0
libtpu: 0.0.40
codegen_flags: <defaults>
</compile_context>

<pallas_src>
import functools

import jax
import jax.numpy as jnp
from jax.experimental import pallas as pl
from jax.experimental.pallas import tpu as pltpu


def _round_up(x, m):
    return ((x + m - 1) // m) * m


def _mlp_kernel(x_ref, w1_ref, b1_ref, w2_ref, b2_ref, w3_ref, b3_ref, o_ref):
    # Cast the activation tile to the MXU streaming dtype inside the kernel
    # (cheap VPU pack; avoids a separate XLA convert pass over x in HBM).
    # Accumulation is f32; bias adds and ReLUs stay f32 on the VPU.
    x = x_ref[...].astype(w1_ref.dtype)
    h = jnp.dot(x, w1_ref[...], preferred_element_type=jnp.float32)
    h = jnp.maximum(h + b1_ref[...], 0.0)
    h = jnp.dot(h.astype(w2_ref.dtype), w2_ref[...],
                preferred_element_type=jnp.float32)
    h = jnp.maximum(h + b2_ref[...], 0.0)
    # Final (feature_dim -> 1) projection against the packed (lanes, pack)
    # weight; b3 is a scalar read from SMEM.
    y = jnp.dot(h.astype(w3_ref.dtype), w3_ref[...],
                preferred_element_type=jnp.float32)
    o_ref[...] = (y + b3_ref[0]).astype(o_ref.dtype)


@functools.partial(jax.jit,
                   static_argnames=("lanes", "max_tile_rows", "use_bf16"))
def dnn_layer_forward(x, w1, b1, w2, b2, w3, b3, *,
                      lanes=256, max_tile_rows=1024, use_bf16=True):
    """Fused 3-layer MLP forward. Returns a tuple (out,) like the module.

    lanes: packed lane width (multiple of 128). 256 fills the v6e/v7x MXU;
           128 is the natural width for v5e (both are correct everywhere).
    max_tile_rows: max packed rows per grid step (x tile = max_tile_rows*lanes).
    """
    B, d_in = x.shape
    d_hid = w1.shape[1]
    d_out = w3.shape[1]
    assert d_out == 1, "kernel specializes final_dim == 1 (module default)"
    assert d_in == d_hid, "lane packing assumes init_dim == feature_dim"
    assert lanes % 128 == 0 and lanes % d_in == 0
    assert max_tile_rows % 8 == 0
    out_dtype = x.dtype

    pack = lanes // d_in                       # original rows per packed row
    b_pack = pl.cdiv(B, pack)                  # packed rows needed
    # Adaptive tile: as large as possible (amortize ~0.35us per grid step) but
    # capped so there are >= 2 grid steps when the batch allows (v7x megacore).
    tile_r = max(8, min(max_tile_rows, _round_up(pl.cdiv(b_pack, 2), 8)))
    num_tiles = pl.cdiv(b_pack, tile_r)
    b_pack_pad = num_tiles * tile_r
    rows_pad = b_pack_pad * pack

    # Padded tail rows compute garbage that is sliced off afterwards; the pad
    # only runs when B is not already tile-aligned.
    if rows_pad != B:
        x = jnp.pad(x, ((0, rows_pad - B), (0, 0)))
    x_packed = x.reshape(b_pack_pad, lanes)    # contiguous row-major: free

    # MXU operand dtype.  Weights are tiny and grid-resident, so preparing
    # them in the wrapper is negligible; x is cast in-kernel (see _mlp_kernel).
    w_dtype = jnp.bfloat16 if use_bf16 else jnp.float32
    eye = jnp.eye(pack, dtype=jnp.float32)
    w1_bd = jnp.kron(eye, w1.astype(jnp.float32)).astype(w_dtype)  # (lanes, lanes)
    w2_bd = jnp.kron(eye, w2.astype(jnp.float32)).astype(w_dtype)  # (lanes, lanes)
    w3_bd = jnp.kron(eye, w3.astype(jnp.float32)).astype(w_dtype)  # (lanes, pack)
    b1_t = jnp.tile(b1.astype(jnp.float32), pack).reshape(1, lanes)
    b2_t = jnp.tile(b2.astype(jnp.float32), pack).reshape(1, lanes)
    b3_s = b3.astype(jnp.float32).reshape(1)                       # SMEM scalar

    out_packed = pl.pallas_call(
        _mlp_kernel,
        out_shape=jax.ShapeDtypeStruct((b_pack_pad, pack), out_dtype),
        grid_spec=pltpu.PrefetchScalarGridSpec(
            num_scalar_prefetch=0,
            grid=(num_tiles,),
            in_specs=[
                pl.BlockSpec((tile_r, lanes), lambda i: (i, 0)),     # x tile
                pl.BlockSpec((lanes, lanes), lambda i: (0, 0)),      # W1 block-diag
                pl.BlockSpec((1, lanes), lambda i: (0, 0)),          # b1 tiled
                pl.BlockSpec((lanes, lanes), lambda i: (0, 0)),      # W2 block-diag
                pl.BlockSpec((1, lanes), lambda i: (0, 0)),          # b2 tiled
                pl.BlockSpec((lanes, pack), lambda i: (0, 0)),       # W3 packed
                pl.BlockSpec(memory_space=pltpu.MemorySpace.SMEM),   # b3 scalar
            ],
            out_specs=pl.BlockSpec((tile_r, pack), lambda i: (i, 0)),
        ),
        compiler_params=pltpu.CompilerParams(
            dimension_semantics=("parallel",)),   # batch axis shards across TCs
    )(x_packed, w1_bd, b1_t, w2_bd, b2_t, w3_bd, b3_s)

    # (b_pack_pad, pack) row-major is exactly the original row order -> (B, 1).
    out = out_packed.reshape(rows_pad, 1)[:B]
    # Module returns a tuple (out,)
    return (out,)


def _init_linear(key, d_in, d_out, dtype=jnp.float32):
    # Deterministic synthetic init (PyTorch-style uniform bound 1/sqrt(fan_in)).
    kw, kb = jax.random.split(key)
    bound = 1.0 / jnp.sqrt(jnp.asarray(d_in, dtype))
    w = jax.random.uniform(kw, (d_in, d_out), dtype, -bound, bound)
    b = jax.random.uniform(kb, (d_out,), dtype, -bound, bound)
    return w, b


def _ref_forward(x, w1, b1, w2, b2, w3, b3):
    h = jnp.maximum(x @ w1 + b1, 0.0)
    h = jnp.maximum(h @ w2 + b2, 0.0)
    return h @ w3 + b3


if __name__ == "__main__":
    # Shapes consistent with the module: init_dim=32, feature_dim=32,
    # n_layers=3, final_dim=1.
    init_dim, feature_dim, final_dim = 32, 32, 1

    key = jax.random.PRNGKey(0)
    kx, k1, k2, k3, kx2 = jax.random.split(key, 5)

    w1, b1 = _init_linear(k1, init_dim, feature_dim)
    w2, b2 = _init_linear(k2, feature_dim, feature_dim)
    w3, b3 = _init_linear(k3, feature_dim, final_dim)

    # Small batch (batch=8), default 256-lane packing.
    x_small = jax.random.normal(kx, (8, init_dim), jnp.float32)
    ref_small = _ref_forward(x_small, w1, b1, w2, b2, w3, b3)

    # f32 path: tight check of forward semantics.
    (out_f32,) = dnn_layer_forward(x_small, w1, b1, w2, b2, w3, b3,
                                   use_bf16=False)
    out_f32 = jax.block_until_ready(out_f32)
    assert out_f32.shape == (8, final_dim)
    assert jnp.allclose(out_f32, ref_small, atol=1e-4, rtol=1e-4)

    # bf16 MXU-operand path (default): loose sanity check.
    (out_bf16,) = dnn_layer_forward(x_small, w1, b1, w2, b2, w3, b3,
                                    use_bf16=True)
    out_bf16 = jax.block_until_ready(out_bf16)
    assert out_bf16.shape == (8, final_dim)
    assert jnp.allclose(out_bf16, ref_small, atol=1e-1, rtol=1e-1)

    # Ragged multi-tile batch: exercises padding, >=2 grid steps, and the
    # 128-lane (v5e-width) packing variant.
    x_big = jax.random.normal(kx2, (1000, init_dim), jnp.float32)
    ref_big = _ref_forward(x_big, w1, b1, w2, b2, w3, b3)
    (out_big,) = dnn_layer_forward(x_big, w1, b1, w2, b2, w3, b3,
                                   lanes=128, use_bf16=False)
    out_big = jax.block_until_ready(out_big)
    assert out_big.shape == (1000, final_dim)
    assert jnp.allclose(out_big, ref_big, atol=1e-4, rtol=1e-4)

    print("KERNEL_OK")
</pallas_src>

<mosaic_0001>
module attributes {stable_mosaic.version = 11 : i64} {
  func.func @_mlp_kernel(%arg0: i32, %arg1: memref<8x256xf32, #tpu.memory_space<vmem>>, %arg2: memref<256x256xf32, #tpu.memory_space<vmem>>, %arg3: memref<1x256xf32, #tpu.memory_space<vmem>>, %arg4: memref<256x256xf32, #tpu.memory_space<vmem>>, %arg5: memref<1x256xf32, #tpu.memory_space<vmem>>, %arg6: memref<256x8xf32, #tpu.memory_space<vmem>>, %arg7: memref<1xf32, #tpu.memory_space<smem>>, %arg8: memref<8x8xf32, #tpu.memory_space<vmem>>) attributes {dimension_semantics = [#tpu.dimension_semantics<parallel>], iteration_bounds = array<i64: 1>, scalar_prefetch = 0 : i64, scratch_operands = 0 : i64, tpu.core_type = #tpu.core_type<tc>, window_params = [{transform_indices = @transform_0, window_bounds = array<i64: 8, 256>}, {pipeline_mode = #tpu.pipeline_mode<synchronous>, transform_indices = @transform_1, window_bounds = array<i64: 256, 256>}, {pipeline_mode = #tpu.pipeline_mode<synchronous>, transform_indices = @transform_2, window_bounds = array<i64: 1, 256>}, {pipeline_mode = #tpu.pipeline_mode<synchronous>, transform_indices = @transform_3, window_bounds = array<i64: 256, 256>}, {pipeline_mode = #tpu.pipeline_mode<synchronous>, transform_indices = @transform_4, window_bounds = array<i64: 1, 256>}, {pipeline_mode = #tpu.pipeline_mode<synchronous>, transform_indices = @transform_5, window_bounds = array<i64: 256, 8>}, {transform_indices = @transform_6, window_bounds = array<i64: 1>}, {transform_indices = @transform_7, window_bounds = array<i64: 8, 8>}]} {
    %c0 = arith.constant 0 : index
    %c0_0 = arith.constant 0 : index
    %0 = vector.load %arg1[%c0, %c0_0] : memref<8x256xf32, #tpu.memory_space<vmem>>, vector<8x256xf32>
    %c0_1 = arith.constant 0 : index
    %c0_2 = arith.constant 0 : index
    %1 = vector.load %arg2[%c0_1, %c0_2] : memref<256x256xf32, #tpu.memory_space<vmem>>, vector<256x256xf32>
    %cst = arith.constant dense<0.000000e+00> : vector<8x256xf32>
    %2 = tpu.matmul %0, %1, %cst {dimension_numbers = #tpu.dot_dimension_numbers<[1], [0], [0], [1], [0, 0, 1, 1], [], []>} : vector<8x256xf32>, vector<256x256xf32>, vector<8x256xf32> -> vector<8x256xf32>
    %c0_3 = arith.constant 0 : index
    %c0_4 = arith.constant 0 : index
    %3 = vector.load %arg3[%c0_3, %c0_4] : memref<1x256xf32, #tpu.memory_space<vmem>>, vector<1x256xf32>
    %4 = vector.broadcast %3 : vector<1x256xf32> to vector<8x256xf32>
    %5 = arith.addf %2, %4 : vector<8x256xf32>
    %cst_5 = arith.constant 0.000000e+00 : f32
    %6 = vector.broadcast %cst_5 : f32 to vector<8x256xf32>
    %7 = arith.maximumf %5, %6 : vector<8x256xf32>
    %c0_6 = arith.constant 0 : index
    %c0_7 = arith.constant 0 : index
    %8 = vector.load %arg4[%c0_6, %c0_7] : memref<256x256xf32, #tpu.memory_space<vmem>>, vector<256x256xf32>
    %cst_8 = arith.constant dense<0.000000e+00> : vector<8x256xf32>
    %9 = tpu.matmul %7, %8, %cst_8 {dimension_numbers = #tpu.dot_dimension_numbers<[1], [0], [0], [1], [0, 0, 1, 1], [], []>} : vector<8x256xf32>, vector<256x256xf32>, vector<8x256xf32> -> vector<8x256xf32>
    %c0_9 = arith.constant 0 : index
    %c0_10 = arith.constant 0 : index
    %10 = vector.load %arg5[%c0_9, %c0_10] : memref<1x256xf32, #tpu.memory_space<vmem>>, vector<1x256xf32>
    %11 = vector.broadcast %10 : vector<1x256xf32> to vector<8x256xf32>
    %12 = arith.addf %9, %11 : vector<8x256xf32>
    %cst_11 = arith.constant 0.000000e+00 : f32
    %13 = vector.broadcast %cst_11 : f32 to vector<8x256xf32>
    %14 = arith.maximumf %12, %13 : vector<8x256xf32>
    %c0_12 = arith.constant 0 : index
    %c0_13 = arith.constant 0 : index
    %15 = vector.load %arg6[%c0_12, %c0_13] : memref<256x8xf32, #tpu.memory_space<vmem>>, vector<256x8xf32>
    %cst_14 = arith.constant dense<0.000000e+00> : vector<8x8xf32>
    %16 = tpu.matmul %14, %15, %cst_14 {dimension_numbers = #tpu.dot_dimension_numbers<[1], [0], [0], [1], [0, 0, 1, 1], [], []>} : vector<8x256xf32>, vector<256x8xf32>, vector<8x8xf32> -> vector<8x8xf32>
    %c0_15 = arith.constant 0 : index
    %17 = memref.load %arg7[%c0_15] : memref<1xf32, #tpu.memory_space<smem>>
    %18 = vector.broadcast %17 : f32 to vector<8x8xf32>
    %19 = arith.addf %16, %18 : vector<8x8xf32>
    %c0_16 = arith.constant 0 : index
    %c0_17 = arith.constant 0 : index
    %20 = vector.load %arg8[%c0_16, %c0_17] : memref<8x8xf32, #tpu.memory_space<vmem>>, vector<8x8xf32>
    tpu.vector_store %arg8[%c0_16, %c0_17], %19 {strides = array<i32>} : memref<8x8xf32, #tpu.memory_space<vmem>>, vector<8x8xf32>,
    return
  }
  func.func @transform_0(%arg0: i32) -> (i32, i32) {
    %c0_i32 = arith.constant 0 : i32
    %c0_i32_0 = arith.constant 0 : i32
    return %arg0, %c0_i32 : i32, i32
  }
  func.func @transform_1(%arg0: i32) -> (i32, i32) {
    %c0_i32 = arith.constant 0 : i32
    %c0_i32_0 = arith.constant 0 : i32
    %c0_i32_1 = arith.constant 0 : i32
    return %c0_i32, %c0_i32_0 : i32, i32
  }
  func.func @transform_2(%arg0: i32) -> (i32, i32) {
    %c0_i32 = arith.constant 0 : i32
    %c0_i32_0 = arith.constant 0 : i32
    %c0_i32_1 = arith.constant 0 : i32
    return %c0_i32, %c0_i32_0 : i32, i32
  }
  func.func @transform_3(%arg0: i32) -> (i32, i32) {
    %c0_i32 = arith.constant 0 : i32
    %c0_i32_0 = arith.constant 0 : i32
    %c0_i32_1 = arith.constant 0 : i32
    return %c0_i32, %c0_i32_0 : i32, i32
  }
  func.func @transform_4(%arg0: i32) -> (i32, i32) {
    %c0_i32 = arith.constant 0 : i32
    %c0_i32_0 = arith.constant 0 : i32
    %c0_i32_1 = arith.constant 0 : i32
    return %c0_i32, %c0_i32_0 : i32, i32
  }
  func.func @transform_5(%arg0: i32) -> (i32, i32) {
    %c0_i32 = arith.constant 0 : i32
    %c0_i32_0 = arith.constant 0 : i32
    %c0_i32_1 = arith.constant 0 : i32
    return %c0_i32, %c0_i32_0 : i32, i32
  }
  func.func @transform_6(%arg0: i32) -> i32 {
    %c0_i32 = arith.constant 0 : i32
    %c0_i32_0 = arith.constant 0 : i32
    return %c0_i32 : i32
  }
  func.func @transform_7(%arg0: i32) -> (i32, i32) {
    %c0_i32 = arith.constant 0 : i32
    %c0_i32_0 = arith.constant 0 : i32
    return %arg0, %c0_i32 : i32, i32
  }
}

</mosaic_0001>

<llo_original>
// kernel: tile.14
$region0: #{tile.14}
  %s0 = inlined_call_operand.vmem [shape: f32[8,32], index: 0, kind: input, shape index: {}]
  %s1 = inlined_call_operand.vmem [shape: f32[1,256], index: 1, kind: output, shape index: {}]
  $region1: #{tile.14} parent=0
    #allocation0 [shape = 'u8[8192]{0}', space=vmem, size = 0x2000, scoped, tag = 'scoped mem for output reshape']
    %s2 = smov 3
    %v3 = vld [vmem:[%s0] ss:$4 sm:%s2]
    %vm4 = vcmask 261120
    %5 = vst.msk [vmem:[#allocation0] ss:$8 sm:$0x3] %vm4, %v3
    %s6 = scalar_lea.vmem %s0, 3
    %s7 = smov 3
    %v8 = vld [vmem:[%s6] ss:$4 sm:%s7]
    %9 = vrot.lane.b32.xlu0 %v8, 96
    %v10 = vpop.permute.xlu0 %9
    %vm11 = vcmask 1048320
    %12 = vst.msk [vmem:[#allocation0] ss:$8 sm:$0x3] %vm11, %v10
    %s13 = scalar_lea.vmem %s0, 2
    %s14 = smov 3
    %v15 = vld [vmem:[%s13] ss:$4 sm:%s14]
    %16 = vrot.lane.b32.xlu0 %v15, 64
    %v17 = vpop.permute.xlu0 %16
    %vm18 = vcmask 785920
    %19 = vst.msk [vmem:[#allocation0] ss:$8 sm:$0x3] %vm18, %v17
    %s20 = scalar_lea.vmem %s0, 1
    %s21 = smov 3
    %v22 = vld [vmem:[%s20] ss:$4 sm:%s21]
    %23 = vrot.lane.b32.xlu0 %v22, 32
    %v24 = vpop.permute.xlu0 %23
    %vm25 = vcmask 523520
    %26 = vst.msk [vmem:[#allocation0] ss:$8 sm:$0x3] %vm25, %v24
    %s28 = ssub.s32 2, 1
    %v29 = vld [vmem:[#allocation0] sm:%s28]
    %s31 = ssub.s32 2, 1
    %32 = vst [vmem:[%s1] sm:%s31] %v29
    %s33 = scalar_lea.vmem [#allocation0], 8
    %v34 = vld [vmem:[%s33] sm:%s28]
    %s36 = ssub.s32 2, 1
    %s37 = scalar_lea.vmem %s1, 1
    %38 = vst [vmem:[%s37] sm:%s36] %v34

// kernel: dnn_layer_forward.1
$region0: #{dnn_layer_forward.1}
  #allocation0 [shape = 'u32[]', space=smem, size = 0x4, offset = 0x4, fixed_abs, tag = 'smem constant byte address 0x4 - core index']
  #allocation1 [shape = 'u32[72,128]{1,0:T(1,128)}', space=vmem, size = 0x9000, scoped, tag = 'internal scratch']
  #allocation2 [shape = 'f32[1]{0:T(128)S(6)}', space=smem, size = 0x200, scoped, tag = 'scoped memory for dnn_layer_forward.1']
  %s0 = inlined_call_operand.vmem [shape: f32[8,256], index: 0, kind: input, shape index: {}]
  %s1 = inlined_call_operand.vmem [shape: f32[256,256], index: 1, kind: input, shape index: {}]
  %s2 = inlined_call_operand.vmem [shape: f32[1,256], index: 2, kind: input, shape index: {}]
  %s3 = inlined_call_operand.vmem [shape: f32[256,256], index: 3, kind: input, shape index: {}]
  %s4 = inlined_call_operand.vmem [shape: f32[1,256], index: 4, kind: input, shape index: {}]
  %s5 = inlined_call_operand.vmem [shape: f32[256,8], index: 5, kind: input, shape index: {}]
  %s6 = inlined_call_operand.<no memory space> [shape: f32[1], index: 6, kind: input, shape index: {}]
  %s7 = inlined_call_operand.vmem [shape: f32[8,8], index: 7, kind: output, shape index: {}]
  %s8 = sld [smem:[#allocation0]]
  $region38: #{dnn_layer_forward.1} parent=0
    _
  %s10 = ssub.s32 1, %s8
  %s11 = scalar_select 0, %s10, %s8
  %12 = sst [smem:[#allocation2]] %s6
  // Predicated region
  $region2: #{dnn_layer_forward.1} parent=0 // pred_check
    _
  $region3: #{dnn_layer_forward.1} parent=0 // pred_check_branch
    %14 = sbr.rel (0) target = $region5
  $region4: #{dnn_layer_forward.1} parent=0 // pred_region
    _
  $region5: #{dnn_layer_forward.1} parent=0 // pred_fallthru
    _
  // Predicated region
  $region6: #{dnn_layer_forward.1} parent=0 // pred_check
    _
  $region7: #{dnn_layer_forward.1} parent=0 // pred_check_branch
    %16 = sbr.rel (0) target = $region9
  $region8: #{dnn_layer_forward.1} parent=0 // pred_region
    _
  $region9: #{dnn_layer_forward.1} parent=0 // pred_fallthru
    _
  // Predicated region
  $region10: #{dnn_layer_forward.1} parent=0 // pred_check
    _
  $region11: #{dnn_layer_forward.1} parent=0 // pred_check_branch
    %18 = sbr.rel (0) target = $region13
  $region12: #{dnn_layer_forward.1} parent=0 // pred_region
    _
  $region13: #{dnn_layer_forward.1} parent=0 // pred_fallthru
    _
  // Predicated region
  $region14: #{dnn_layer_forward.1} parent=0 // pred_check
    _
  $region15: #{dnn_layer_forward.1} parent=0 // pred_check_branch
    %20 = sbr.rel (0) target = $region17
  $region16: #{dnn_layer_forward.1} parent=0 // pred_region
    _
  $region17: #{dnn_layer_forward.1} parent=0 // pred_fallthru
    _
  // Predicated region
  $region18: #{dnn_layer_forward.1} parent=0 // pred_check
    _
  $region19: #{dnn_layer_forward.1} parent=0 // pred_check_branch
    %22 = sbr.rel (0) target = $region21
  $region20: #{dnn_layer_forward.1} parent=0 // pred_region
    _
  $region21: #{dnn_layer_forward.1} parent=0 // pred_fallthru
    _
  // Predicated region
  $region22: #{dnn_layer_forward.1} parent=0 // pred_check
    _
  $region23: #{dnn_layer_forward.1} parent=0 // pred_check_branch
    %24 = sbr.rel (0) target = $region25
  $region24: #{dnn_layer_forward.1} parent=0 // pred_region
    _
  $region25: #{dnn_layer_forward.1} parent=0 // pred_fallthru
    _
  // Predicated region
  $region26: #{dnn_layer_forward.1} parent=0 // pred_check
    _
  $region27: #{dnn_layer_forward.1} parent=0 // pred_check_branch
    %26 = sbr.rel (0) target = $region29
  $region28: #{dnn_layer_forward.1} parent=0 // pred_region
    _
  $region29: #{dnn_layer_forward.1} parent=0 // pred_fallthru
    _
  %v27 = vld [vmem:[%s0] sm:$0xff]
  %v28 = vld [vmem:[%s0 + $0x8] sm:$0xff]
  %v29 = vld [vmem:[%s1] sm:$0xff]
  %v30 = vld [vmem:[%s1 + $0x8] sm:$0xff]
  %v31 = vld [vmem:[%s1 + $0x10] sm:$0xff]
  %v32 = vld [vmem:[%s1 + $0x18] sm:$0xff]
  %v33 = vld [vmem:[%s1 + $0x20] sm:$0xff]
  %v34 = vld [vmem:[%s1 + $0x28] sm:$0xff]
  %v35 = vld [vmem:[%s1 + $0x30] sm:$0xff]
  %v36 = vld [vmem:[%s1 + $0x38] sm:$0xff]
  %v37 = vld [vmem:[%s1 + $0x40] sm:$0xff]
  %v38 = vld [vmem:[%s1 + $0x48] sm:$0xff]
  %v39 = vld [vmem:[%s1 + $0x50] sm:$0xff]
  %v40 = vld [vmem:[%s1 + $0x58] sm:$0xff]
  %v41 = vld [vmem:[%s1 + $0x60] sm:$0xff]
  %v42 = vld [vmem:[%s1 + $0x68] sm:$0xff]
  %v43 = vld [vmem:[%s1 + $0x70] sm:$0xff]
  %v44 = vld [vmem:[%s1 + $0x78] sm:$0xff]
  %v45 = vld [vmem:[%s1 + $0x80] sm:$0xff]
  %v46 = vld [vmem:[%s1 + $0x88] sm:$0xff]
  %v47 = vld [vmem:[%s1 + $0x90] sm:$0xff]
  %v48 = vld [vmem:[%s1 + $0x98] sm:$0xff]
  %v49 = vld [vmem:[%s1 + $0xa0] sm:$0xff]
  %v50 = vld [vmem:[%s1 + $0xa8] sm:$0xff]
  %v51 = vld [vmem:[%s1 + $0xb0] sm:$0xff]
  %v52 = vld [vmem:[%s1 + $0xb8] sm:$0xff]
  %v53 = vld [vmem:[%s1 + $0xc0] sm:$0xff]
  %v54 = vld [vmem:[%s1 + $0xc8] sm:$0xff]
  %v55 = vld [vmem:[%s1 + $0xd0] sm:$0xff]
  %v56 = vld [vmem:[%s1 + $0xd8] sm:$0xff]
  %v57 = vld [vmem:[%s1 + $0xe0] sm:$0xff]
  %v58 = vld [vmem:[%s1 + $0xe8] sm:$0xff]
  %v59 = vld [vmem:[%s1 + $0xf0] sm:$0xff]
  %v60 = vld [vmem:[%s1 + $0xf8] sm:$0xff]
  %v61 = vld [vmem:[%s1 + $0x100] sm:$0xff]
  %v62 = vld [vmem:[%s1 + $0x108] sm:$0xff]
  %v63 = vld [vmem:[%s1 + $0x110] sm:$0xff]
  %v64 = vld [vmem:[%s1 + $0x118] sm:$0xff]
  %v65 = vld [vmem:[%s1 + $0x120] sm:$0xff]
  %v66 = vld [vmem:[%s1 + $0x128] sm:$0xff]
  %v67 = vld [vmem:[%s1 + $0x130] sm:$0xff]
  %v68 = vld [vmem:[%s1 + $0x138] sm:$0xff]
  %v69 = vld [vmem:[%s1 + $0x140] sm:$0xff]
  %v70 = vld [vmem:[%s1 + $0x148] sm:$0xff]
  %v71 = vld [vmem:[%s1 + $0x150] sm:$0xff]
  %v72 = vld [vmem:[%s1 + $0x158] sm:$0xff]
  %v73 = vld [vmem:[%s1 + $0x160] sm:$0xff]
  %v74 = vld [vmem:[%s1 + $0x168] sm:$0xff]
  %v75 = vld [vmem:[%s1 + $0x170] sm:$0xff]
  %v76 = vld [vmem:[%s1 + $0x178] sm:$0xff]
  %v77 = vld [vmem:[%s1 + $0x180] sm:$0xff]
  %v78 = vld [vmem:[%s1 + $0x188] sm:$0xff]
  %v79 = vld [vmem:[%s1 + $0x190] sm:$0xff]
  %v80 = vld [vmem:[%s1 + $0x198] sm:$0xff]
  %v81 = vld [vmem:[%s1 + $0x1a0] sm:$0xff]
  %v82 = vld [vmem:[%s1 + $0x1a8] sm:$0xff]
  %v83 = vld [vmem:[%s1 + $0x1b0] sm:$0xff]
  %v84 = vld [vmem:[%s1 + $0x1b8] sm:$0xff]
  %v85 = vld [vmem:[%s1 + $0x1c0] sm:$0xff]
  %v86 = vld [vmem:[%s1 + $0x1c8] sm:$0xff]
  %v87 = vld [vmem:[%s1 + $0x1d0] sm:$0xff]
  %v88 = vld [vmem:[%s1 + $0x1d8] sm:$0xff]
  %v89 = vld [vmem:[%s1 + $0x1e0] sm:$0xff]
  %v90 = vld [vmem:[%s1 + $0x1e8] sm:$0xff]
  %v91 = vld [vmem:[%s1 + $0x1f0] sm:$0xff]
  %v92 = vld [vmem:[%s1 + $0x1f8] sm:$0xff]
  %v93 = vld [vmem:[%s2] sm:$0x3]
  %v95 = vperm.slane %v93, 0
  %v96 = vperm.slane %v93, 1
  %99 = vmatpush.msra.mxu0 %v59
  %100 = vmatpush.msra.mxu0 %v57
  %101 = vmatpush.msra.mxu0 %v55
  %102 = vmatpush.msra.mxu0 %v53
  %103 = vmatpush.msra.mxu0 %v51
  %104 = vmatpush.msra.mxu0 %v49
  %105 = vmatpush.msra.mxu0 %v47
  %106 = vmatpush.msra.mxu0 %v45
  %107 = vmatpush.msra.mxu0 %v43
  %108 = vmatpush.msra.mxu0 %v41
  %109 = vmatpush.msra.mxu0 %v39
  %110 = vmatpush.msra.mxu0 %v37
  %111 = vmatpush.msra.mxu0 %v35
  %112 = vmatpush.msra.mxu0 %v33
  %113 = vmatpush.msra.mxu0 %v31
  %114 = vmatpush.msra.mxu0 %v29
  %115 = vmatmul.f32.gmra.mxu0 %v27
  %v116 = vpop.f32.mrf.mxu0
  %v117 = vadd.f32 %v95, %v116
  %118 = vdwg.mxu0
  %119 = vmatpush.msra.mxu0 %v91
  %120 = vmatpush.msra.mxu0 %v89
  %121 = vmatpush.msra.mxu0 %v87
  %122 = vmatpush.msra.mxu0 %v85
  %123 = vmatpush.msra.mxu0 %v83
  %124 = vmatpush.msra.mxu0 %v81
  %125 = vmatpush.msra.mxu0 %v79
  %126 = vmatpush.msra.mxu0 %v77
  %127 = vmatpush.msra.mxu0 %v75
  %128 = vmatpush.msra.mxu0 %v73
  %129 = vmatpush.msra.mxu0 %v71
  %130 = vmatpush.msra.mxu0 %v69
  %131 = vmatpush.msra.mxu0 %v67
  %132 = vmatpush.msra.mxu0 %v65
  %133 = vmatpush.msra.mxu0 %v63
  %134 = vmatpush.msra.mxu0 %v61
  %135 = vmatmul.f32.gmra.mxu0 %v28
  %v136 = vpop.f32.mrf.mxu0
  %v137 = vadd.f32 %v117, %v136
  %138 = vdwg.mxu0
  %139 = vmatpush.msra.mxu0 %v60
  %140 = vmatpush.msra.mxu0 %v58
  %141 = vmatpush.msra.mxu0 %v56
  %142 = vmatpush.msra.mxu0 %v54
  %143 = vmatpush.msra.mxu0 %v52
  %144 = vmatpush.msra.mxu0 %v50
  %145 = vmatpush.msra.mxu0 %v48
  %146 = vmatpush.msra.mxu0 %v46
  %147 = vmatpush.msra.mxu0 %v44
  %148 = vmatpush.msra.mxu0 %v42
  %149 = vmatpush.msra.mxu0 %v40
  %150 = vmatpush.msra.mxu0 %v38
  %151 = vmatpush.msra.mxu0 %v36
  %152 = vmatpush.msra.mxu0 %v34
  %153 = vmatpush.msra.mxu0 %v32
  %154 = vmatpush.msra.mxu0 %v30
  %155 = vmatmul.f32.gmra.mxu0 %v27
  %v156 = vpop.f32.mrf.mxu0
  %v157 = vadd.f32 %v96, %v156
  %158 = vdwg.mxu0
  %159 = vmatpush.msra.mxu0 %v92
  %160 = vmatpush.msra.mxu0 %v90
  %161 = vmatpush.msra.mxu0 %v88
  %162 = vmatpush.msra.mxu0 %v86
  %163 = vmatpush.msra.mxu0 %v84
  %164 = vmatpush.msra.mxu0 %v82
  %165 = vmatpush.msra.mxu0 %v80
  %166 = vmatpush.msra.mxu0 %v78
  %167 = vmatpush.msra.mxu0 %v76
  %168 = vmatpush.msra.mxu0 %v74
  %169 = vmatpush.msra.mxu0 %v72
  %170 = vmatpush.msra.mxu0 %v70
  %171 = vmatpush.msra.mxu0 %v68
  %172 = vmatpush.msra.mxu0 %v66
  %173 = vmatpush.msra.mxu0 %v64
  %174 = vmatpush.msra.mxu0 %v62
  %175 = vmatmul.f32.gmra.mxu0 %v28
  %v176 = vpop.f32.mrf.mxu0
  %v177 = vadd.f32 %v157, %v176
  %178 = vdwg.mxu0
  %v179 = vmax.f32 %v137, 0.0
  %v180 = vmax.f32 %v177, 0.0
  %v181 = vld [vmem:[%s3] sm:$0xff]
  %v182 = vld [vmem:[%s3 + $0x8] sm:$0xff]
  %v183 = vld [vmem:[%s3 + $0x10] sm:$0xff]
  %v184 = vld [vmem:[%s3 + $0x18] sm:$0xff]
  %v185 = vld [vmem:[%s3 + $0x20] sm:$0xff]
  %v186 = vld [vmem:[%s3 + $0x28] sm:$0xff]
  %v187 = vld [vmem:[%s3 + $0x30] sm:$0xff]
  %v188 = vld [vmem:[%s3 + $0x38] sm:$0xff]
  %v189 = vld [vmem:[%s3 + $0x40] sm:$0xff]
  %v190 = vld [vmem:[%s3 + $0x48] sm:$0xff]
  %v191 = vld [vmem:[%s3 + $0x50] sm:$0xff]
  %v192 = vld [vmem:[%s3 + $0x58] sm:$0xff]
  %v193 = vld [vmem:[%s3 + $0x60] sm:$0xff]
  %v194 = vld [vmem:[%s3 + $0x68] sm:$0xff]
  %v195 = vld [vmem:[%s3 + $0x70] sm:$0xff]
  %v196 = vld [vmem:[%s3 + $0x78] sm:$0xff]
  %v197 = vld [vmem:[%s3 + $0x80] sm:$0xff]
  %v198 = vld [vmem:[%s3 + $0x88] sm:$0xff]
  %v199 = vld [vmem:[%s3 + $0x90] sm:$0xff]
  %v200 = vld [vmem:[%s3 + $0x98] sm:$0xff]
  %v201 = vld [vmem:[%s3 + $0xa0] sm:$0xff]
  %v202 = vld [vmem:[%s3 + $0xa8] sm:$0xff]
  %v203 = vld [vmem:[%s3 + $0xb0] sm:$0xff]
  %v204 = vld [vmem:[%s3 + $0xb8] sm:$0xff]
  %v205 = vld [vmem:[%s3 + $0xc0] sm:$0xff]
  %v206 = vld [vmem:[%s3 + $0xc8] sm:$0xff]
  %v207 = vld [vmem:[%s3 + $0xd0] sm:$0xff]
  %v208 = vld [vmem:[%s3 + $0xd8] sm:$0xff]
  %v209 = vld [vmem:[%s3 + $0xe0] sm:$0xff]
  %v210 = vld [vmem:[%s3 + $0xe8] sm:$0xff]
  %v211 = vld [vmem:[%s3 + $0xf0] sm:$0xff]
  %v212 = vld [vmem:[%s3 + $0xf8] sm:$0xff]
  %v213 = vld [vmem:[%s3 + $0x100] sm:$0xff]
  %v214 = vld [vmem:[%s3 + $0x108] sm:$0xff]
  %v215 = vld [vmem:[%s3 + $0x110] sm:$0xff]
  %v216 = vld [vmem:[%s3 + $0x118] sm:$0xff]
  %v217 = vld [vmem:[%s3 + $0x120] sm:$0xff]
  %v218 = vld [vmem:[%s3 + $0x128] sm:$0xff]
  %v219 = vld [vmem:[%s3 + $0x130] sm:$0xff]
  %v220 = vld [vmem:[%s3 + $0x138] sm:$0xff]
  %v221 = vld [vmem:[%s3 + $0x140] sm:$0xff]
  %v222 = vld [vmem:[%s3 + $0x148] sm:$0xff]
  %v223 = vld [vmem:[%s3 + $0x150] sm:$0xff]
  %v224 = vld [vmem:[%s3 + $0x158] sm:$0xff]
  %v225 = vld [vmem:[%s3 + $0x160] sm:$0xff]
  %v226 = vld [vmem:[%s3 + $0x168] sm:$0xff]
  %v227 = vld [vmem:[%s3 + $0x170] sm:$0xff]
  %v228 = vld [vmem:[%s3 + $0x178] sm:$0xff]
  %v229 = vld [vmem:[%s3 + $0x180] sm:$0xff]
  %v230 = vld [vmem:[%s3 + $0x188] sm:$0xff]
  %v231 = vld [vmem:[%s3 + $0x190] sm:$0xff]
  %v232 = vld [vmem:[%s3 + $0x198] sm:$0xff]
  %v233 = vld [vmem:[%s3 + $0x1a0] sm:$0xff]
  %v234 = vld [vmem:[%s3 + $0x1a8] sm:$0xff]
  %v235 = vld [vmem:[%s3 + $0x1b0] sm:$0xff]
  %v236 = vld [vmem:[%s3 + $0x1b8] sm:$0xff]
  %v237 = vld [vmem:[%s3 + $0x1c0] sm:$0xff]
  %v238 = vld [vmem:[%s3 + $0x1c8] sm:$0xff]
  %v239 = vld [vmem:[%s3 + $0x1d0] sm:$0xff]
  %v240 = vld [vmem:[%s3 + $0x1d8] sm:$0xff]
  %v241 = vld [vmem:[%s3 + $0x1e0] sm:$0xff]
  %v242 = vld [vmem:[%s3 + $0x1e8] sm:$0xff]
  %v243 = vld [vmem:[%s3 + $0x1f0] sm:$0xff]
  %v244 = vld [vmem:[%s3 + $0x1f8] sm:$0xff]
  %v245 = vld [vmem:[%s4] sm:$0x3]
  %v247 = vperm.slane %v245, 0
  %v248 = vperm.slane %v245, 1
  %251 = vmatpush.msra.mxu0 %v211
  %252 = vmatpush.msra.mxu0 %v209
  %253 = vmatpush.msra.mxu0 %v207
  %254 = vmatpush.msra.mxu0 %v205
  %255 = vmatpush.msra.mxu0 %v203
  %256 = vmatpush.msra.mxu0 %v201
  %257 = vmatpush.msra.mxu0 %v199
  %258 = vmatpush.msra.mxu0 %v197
  %259 = vmatpush.msra.mxu0 %v195
  %260 = vmatpush.msra.mxu0 %v193
  %261 = vmatpush.msra.mxu0 %v191
  %262 = vmatpush.msra.mxu0 %v189
  %263 = vmatpush.msra.mxu0 %v187
  %264 = vmatpush.msra.mxu0 %v185
  %265 = vmatpush.msra.mxu0 %v183
  %266 = vmatpush.msra.mxu0 %v181
  %267 = vmatmul.f32.gmra.mxu0 %v179
  %v268 = vpop.f32.mrf.mxu0
  %v269 = vadd.f32 %v247, %v268
  %270 = vdwg.mxu0
  %271 = vmatpush.msra.mxu0 %v243
  %272 = vmatpush.msra.mxu0 %v241
  %273 = vmatpush.msra.mxu0 %v239
  %274 = vmatpush.msra.mxu0 %v237
  %275 = vmatpush.msra.mxu0 %v235
  %276 = vmatpush.msra.mxu0 %v233
  %277 = vmatpush.msra.mxu0 %v231
  %278 = vmatpush.msra.mxu0 %v229
  %279 = vmatpush.msra.mxu0 %v227
  %280 = vmatpush.msra.mxu0 %v225
  %281 = vmatpush.msra.mxu0 %v223
  %282 = vmatpush.msra.mxu0 %v221
  %283 = vmatpush.msra.mxu0 %v219
  %284 = vmatpush.msra.mxu0 %v217
  %285 = vmatpush.msra.mxu0 %v215
  %286 = vmatpush.msra.mxu0 %v213
  %287 = vmatmul.f32.gmra.mxu0 %v180
  %v288 = vpop.f32.mrf.mxu0
  %v289 = vadd.f32 %v269, %v288
  %290 = vdwg.mxu0
  %291 = vmatpush.msra.mxu0 %v212
  %292 = vmatpush.msra.mxu0 %v210
  %293 = vmatpush.msra.mxu0 %v208
  %294 = vmatpush.msra.mxu0 %v206
  %295 = vmatpush.msra.mxu0 %v204
  %296 = vmatpush.msra.mxu0 %v202
  %297 = vmatpush.msra.mxu0 %v200
  %298 = vmatpush.msra.mxu0 %v198
  %299 = vmatpush.msra.mxu0 %v196
  %300 = vmatpush.msra.mxu0 %v194
  %301 = vmatpush.msra.mxu0 %v192
  %302 = vmatpush.msra.mxu0 %v190
  %303 = vmatpush.msra.mxu0 %v188
  %304 = vmatpush.msra.mxu0 %v186
  %305 = vmatpush.msra.mxu0 %v184
  %306 = vmatpush.msra.mxu0 %v182
  %307 = vmatmul.f32.gmra.mxu0 %v179
  %v308 = vpop.f32.mrf.mxu0
  %v309 = vadd.f32 %v248, %v308
  %310 = vdwg.mxu0
  %311 = vmatpush.msra.mxu0 %v244
  %312 = vmatpush.msra.mxu0 %v242
  %313 = vmatpush.msra.mxu0 %v240
  %314 = vmatpush.msra.mxu0 %v238
  %315 = vmatpush.msra.mxu0 %v236
  %316 = vmatpush.msra.mxu0 %v234
  %317 = vmatpush.msra.mxu0 %v232
  %318 = vmatpush.msra.mxu0 %v230
  %319 = vmatpush.msra.mxu0 %v228
  %320 = vmatpush.msra.mxu0 %v226
  %321 = vmatpush.msra.mxu0 %v224
  %322 = vmatpush.msra.mxu0 %v222
  %323 = vmatpush.msra.mxu0 %v220
  %324 = vmatpush.msra.mxu0 %v218
  %325 = vmatpush.msra.mxu0 %v216
  %326 = vmatpush.msra.mxu0 %v214
  %327 = vmatmul.f32.gmra.mxu0 %v180
  %v328 = vpop.f32.mrf.mxu0
  %v329 = vadd.f32 %v309, %v328
  %330 = vdwg.mxu0
  %v331 = vmax.f32 %v289, 0.0
  %v332 = vmax.f32 %v329, 0.0
  %v333 = vld [vmem:[%s5] sm:$0xff]
  %v334 = vld [vmem:[%s5 + $0x8] sm:$0xff]
  %v335 = vld [vmem:[%s5 + $0x10] sm:$0xff]
  %v336 = vld [vmem:[%s5 + $0x18] sm:$0xff]
  %v337 = vld [vmem:[%s5 + $0x20] sm:$0xff]
  %v338 = vld [vmem:[%s5 + $0x28] sm:$0xff]
  %v339 = vld [vmem:[%s5 + $0x30] sm:$0xff]
  %v340 = vld [vmem:[%s5 + $0x38] sm:$0xff]
  %v341 = vld [vmem:[%s5 + $0x40] sm:$0xff]
  %v342 = vld [vmem:[%s5 + $0x48] sm:$0xff]
  %v343 = vld [vmem:[%s5 + $0x50] sm:$0xff]
  %v344 = vld [vmem:[%s5 + $0x58] sm:$0xff]
  %v345 = vld [vmem:[%s5 + $0x60] sm:$0xff]
  %v346 = vld [vmem:[%s5 + $0x68] sm:$0xff]
  %v347 = vld [vmem:[%s5 + $0x70] sm:$0xff]
  %v348 = vld [vmem:[%s5 + $0x78] sm:$0xff]
  %v349 = vld [vmem:[%s5 + $0x80] sm:$0xff]
  %v350 = vld [vmem:[%s5 + $0x88] sm:$0xff]
  %v351 = vld [vmem:[%s5 + $0x90] sm:$0xff]
  %v352 = vld [vmem:[%s5 + $0x98] sm:$0xff]
  %v353 = vld [vmem:[%s5 + $0xa0] sm:$0xff]
  %v354 = vld [vmem:[%s5 + $0xa8] sm:$0xff]
  %v355 = vld [vmem:[%s5 + $0xb0] sm:$0xff]
  %v356 = vld [vmem:[%s5 + $0xb8] sm:$0xff]
  %v357 = vld [vmem:[%s5 + $0xc0] sm:$0xff]
  %v358 = vld [vmem:[%s5 + $0xc8] sm:$0xff]
  %v359 = vld [vmem:[%s5 + $0xd0] sm:$0xff]
  %v360 = vld [vmem:[%s5 + $0xd8] sm:$0xff]
  %v361 = vld [vmem:[%s5 + $0xe0] sm:$0xff]
  %v362 = vld [vmem:[%s5 + $0xe8] sm:$0xff]
  %v363 = vld [vmem:[%s5 + $0xf0] sm:$0xff]
  %v364 = vld [vmem:[%s5 + $0xf8] sm:$0xff]
  %s365 = sld [smem:[#allocation2]]
  %v366 = vstv %s365
  %367 = vmatpush.msra.mxu0 %v348
  %368 = vmatpush.msra.mxu0 %v347
  %369 = vmatpush.msra.mxu0 %v346
  %370 = vmatpush.msra.mxu0 %v345
  %371 = vmatpush.msra.mxu0 %v344
  %372 = vmatpush.msra.mxu0 %v343
  %373 = vmatpush.msra.mxu0 %v342
  %374 = vmatpush.msra.mxu0 %v341
  %375 = vmatpush.msra.mxu0 %v340
  %376 = vmatpush.msra.mxu0 %v339
  %377 = vmatpush.msra.mxu0 %v338
  %378 = vmatpush.msra.mxu0 %v337
  %379 = vmatpush.msra.mxu0 %v336
  %380 = vmatpush.msra.mxu0 %v335
  %381 = vmatpush.msra.mxu0 %v334
  %382 = vmatpush.msra.mxu0 %v333
  %383 = vmatmul.f32.gmra.mxu0 %v331
  %v384 = vpop.f32.mrf.mxu0
  %v385 = vadd.f32 %v366, %v384
  %386 = vdwg.mxu0
  %387 = vmatpush.msra.mxu0 %v364
  %388 = vmatpush.msra.mxu0 %v363
  %389 = vmatpush.msra.mxu0 %v362
  %390 = vmatpush.msra.mxu0 %v361
  %391 = vmatpush.msra.mxu0 %v360
  %392 = vmatpush.msra.mxu0 %v359
  %393 = vmatpush.msra.mxu0 %v358
  %394 = vmatpush.msra.mxu0 %v357
  %395 = vmatpush.msra.mxu0 %v356
  %396 = vmatpush.msra.mxu0 %v355
  %397 = vmatpush.msra.mxu0 %v354
  %398 = vmatpush.msra.mxu0 %v353
  %399 = vmatpush.msra.mxu0 %v352
  %400 = vmatpush.msra.mxu0 %v351
  %401 = vmatpush.msra.mxu0 %v350
  %402 = vmatpush.msra.mxu0 %v349
  %403 = vmatmul.f32.gmra.mxu0 %v332
  %v404 = vpop.f32.mrf.mxu0
  %v405 = vadd.f32 %v385, %v404
  %406 = vdwg.mxu0
  %vm407 = vcmask 64512
  %408 = vst.msk [vmem:[%s7] sm:$0xff] %vm407, %v405
  // Predicated region
  $region30: #{dnn_layer_forward.1} parent=0 // pred_check
    _
  $region31: #{dnn_layer_forward.1} parent=0 // pred_check_branch
    %410 = sbr.rel (0) target = $region33
  $region32: #{dnn_layer_forward.1} parent=0 // pred_region
    _
  $region33: #{dnn_layer_forward.1} parent=0 // pred_fallthru
    _
  // Predicated region
  $region34: #{dnn_layer_forward.1} parent=0 // pred_check
    _
  $region35: #{dnn_layer_forward.1} parent=0 // pred_check_branch
    %412 = sbr.rel (0) target = $region37
  $region36: #{dnn_layer_forward.1} parent=0 // pred_region
    _
  $region37: #{dnn_layer_forward.1} parent=0 // pred_fallthru
    _

</llo_original>
